<compile_context>
chip_gen: v6e
topology: v6e:2x2x1
jax: 0.10.0
libtpu: 0.0.40
codegen_flags: <defaults>
</compile_context>

<pallas_src>
import jax
import jax.numpy as jnp
from jax import lax
from jax.experimental import pallas as pl
from jax.experimental.pallas import tpu as pltpu


_DEFAULT_VMEM_LIMIT = 32 * 1024 * 1024  # safe scoped-VMEM limit on v5e/v6e/v7x


def _round_up(n, m):
    return ((n + m - 1) // m) * m


# --------------------------------------------------------------------------- #
# Kernels (feature-major activations: [features, TILE_B], batch on lanes)
# --------------------------------------------------------------------------- #
def _mlp_hidden(x, w1_ref, b1_ref, w2_ref, b2_ref):
    # x: [3, TILE_B] f32; returns h2: [16, TILE_B] f32.
    h1 = jnp.dot(w1_ref[...], x, preferred_element_type=jnp.float32) + b1_ref[...]
    h1 = jnp.maximum(h1, 0.0)
    h2 = jnp.dot(w2_ref[...], h1, preferred_element_type=jnp.float32) + b2_ref[...]
    h2 = jnp.maximum(h2, 0.0)
    return h2


def mlp_kernel_batch_major_out(x_ref, w1_ref, b1_ref, w2_ref, b2_ref,
                               w3_ref, b3_ref, o_ref):
    # x_ref: [3, TILE_B] f32; o_ref: [TILE_B, 5] f32 (PyTorch layout).
    h2 = _mlp_hidden(x_ref[...], w1_ref, b1_ref, w2_ref, b2_ref)
    # out[b, j] = sum_k h2[k, b] * w3[j, k]   (emit [B,5] directly; accept the
    # masked 5-lane store — one f32 write beats write + transpose + cast).
    out = lax.dot_general(h2, w3_ref[...],
                          dimension_numbers=(((0,), (1,)), ((), ())),
                          preferred_element_type=jnp.float32) + b3_ref[...]
    o_ref[...] = out.astype(o_ref.dtype)


def mlp_kernel_lane_dense_out(x_ref, w1_ref, b1_ref, w2_ref, b2_ref,
                              w3_ref, b3_ref, o_ref):
    # o_ref: [5, TILE_B] f32 — fully lane-dense store (batch on the lane axis).
    h2 = _mlp_hidden(x_ref[...], w1_ref, b1_ref, w2_ref, b2_ref)
    out_t = jnp.dot(w3_ref[...], h2, preferred_element_type=jnp.float32) + b3_ref[...]
    o_ref[...] = out_t.astype(o_ref.dtype)


# --------------------------------------------------------------------------- #
# Wrapper
# --------------------------------------------------------------------------- #
def _choose_tile_b(B, tile_b):
    if B <= 128:
        return B                         # single block == full array dims
    t = _round_up(max(tile_b, 128), 128)
    t = min(t, _round_up(B, 128))        # never larger than one padded tile of B
    t = min(t, _round_up(pl.cdiv(B, 2), 128))   # >= 2 tiles so v7x uses both TCs
    return max(t, 128)


def phone_recommendation_forward(x_fm, params, *, tile_b=16384,
                                 lane_dense_output=False,
                                 vmem_limit_bytes=None):
    """Forward pass.

    x_fm: feature-major input of shape [3, B] float32 (transpose PyTorch's
          [B, 3] once upstream — like the weights, this is layout plumbing
          done outside the hot loop).
    Returns [B, 5] float32 (PyTorch semantics) by default, or the raw
    lane-dense [5, B] float32 slab if lane_dense_output=True.

    tile_b guidance: v5e ~8-16K, v6e ~16-32K, v7x >=32K rows per tile
    (feature-major tiles are tiny in VMEM; the [B,5] output path additionally
    keeps a lane-padded ~tile_b*512 B output buffer, covered by the default
    32 MiB vmem_limit up to tile_b=16K — raise vmem_limit_bytes to go bigger).
    """
    f_in, B = x_fm.shape
    assert f_in == 3, f"expected feature-major x of shape [3, B], got {x_fm.shape}"
    x_fm = x_fm.astype(jnp.float32)

    tb = _choose_tile_b(B, tile_b)
    n_tiles = pl.cdiv(B, tb)             # ragged last tile is masked by Pallas

    w1, b1 = params["w1"], params["b1"]
    w2, b2 = params["w2"], params["b2"]
    w3 = params["w3"]
    b3 = params["b3_col"] if lane_dense_output else params["b3_row"]

    # Constant index_map -> block never changes -> DMA'd once, VMEM-resident.
    resident = lambda a: pl.BlockSpec(a.shape, lambda i: (0, 0))

    cost = pl.CostEstimate(
        flops=2 * B * (3 * 16 + 16 * 16 + 16 * 5),
        transcendentals=0,
        bytes_accessed=B * (3 + 5) * 4
        + sum(int(a.size) * 4 for a in (w1, b1, w2, b2, w3, b3)),
    )
    cparams = pltpu.CompilerParams(
        dimension_semantics=("parallel",),   # shard batch tiles over v7x's 2 TCs
        vmem_limit_bytes=(vmem_limit_bytes if vmem_limit_bytes is not None
                          else _DEFAULT_VMEM_LIMIT),
    )

    if lane_dense_output:
        kernel = mlp_kernel_lane_dense_out
        out_shape = jax.ShapeDtypeStruct((5, B), jnp.float32)
        out_spec = pl.BlockSpec((5, tb), lambda i: (0, i))
    else:
        kernel = mlp_kernel_batch_major_out
        out_shape = jax.ShapeDtypeStruct((B, 5), jnp.float32)
        out_spec = pl.BlockSpec((tb, 5), lambda i: (i, 0))

    return pl.pallas_call(
        kernel,
        out_shape=out_shape,
        grid=(n_tiles,),
        in_specs=[
            pl.BlockSpec((3, tb), lambda i: (0, i)),   # streamed feature-major x
            resident(w1), resident(b1),
            resident(w2), resident(b2),
            resident(w3), resident(b3),
        ],
        out_specs=out_spec,
        compiler_params=cparams,
        cost_estimate=cost,
    )(x_fm, w1, b1, w2, b2, w3, b3)


# --------------------------------------------------------------------------- #
# Parameters / reference
# --------------------------------------------------------------------------- #
def init_torch_params(key):
    """PyTorch nn.Linear-layout params: W [out, in], b [out], U(-1/sqrt(in), 1/sqrt(in))."""
    ks = jax.random.split(key, 6)

    def linear(kw, kb, fan_in, fan_out):
        bound = 1.0 / jnp.sqrt(fan_in)
        w = jax.random.uniform(kw, (fan_out, fan_in), jnp.float32, -bound, bound)
        b = jax.random.uniform(kb, (fan_out,), jnp.float32, -bound, bound)
        return w, b

    w1, b1 = linear(ks[0], ks[1], 3, 16)
    w2, b2 = linear(ks[2], ks[3], 16, 16)
    w3, b3 = linear(ks[4], ks[5], 16, 5)
    return {"w1": w1, "b1": b1, "w2": w2, "b2": b2, "w3": w3, "b3": b3}


def prepare_kernel_params(p):
    """Feature-major kernel params (weights stay in native PyTorch [out, in])."""
    return {
        "w1": p["w1"].astype(jnp.float32),                 # [16, 3]
        "b1": p["b1"].reshape(16, 1).astype(jnp.float32),
        "w2": p["w2"].astype(jnp.float32),                 # [16, 16]
        "b2": p["b2"].reshape(16, 1).astype(jnp.float32),
        "w3": p["w3"].astype(jnp.float32),                 # [5, 16]
        "b3_col": p["b3"].reshape(5, 1).astype(jnp.float32),
        "b3_row": p["b3"].reshape(1, 5).astype(jnp.float32),
    }


def reference_forward(x, p):
    """Pure-JAX f32 reference matching the PyTorch module exactly (x: [B, 3])."""
    h1 = jnp.maximum(x @ p["w1"].T + p["b1"], 0.0)
    h2 = jnp.maximum(h1 @ p["w2"].T + p["b2"], 0.0)
    return h2 @ p["w3"].T + p["b3"]


# --------------------------------------------------------------------------- #
# Self-test
# --------------------------------------------------------------------------- #
if __name__ == "__main__":
    key = jax.random.PRNGKey(0)
    k_x, k_p = jax.random.split(key)

    torch_params = init_torch_params(k_p)
    kparams = prepare_kernel_params(torch_params)

    # Multi-tile + ragged-tail case: B=200 -> tile clamps to 128, grid=(2,),
    # last block masked on writeback.
    B = 200
    x = jax.random.normal(k_x, (B, 3), dtype=jnp.float32)   # PyTorch layout
    x_fm = x.T                                              # feature-major [3, B], done once upstream
    ref = reference_forward(x, torch_params)

    out = jax.block_until_ready(phone_recommendation_forward(x_fm, kparams))
    assert out.shape == (B, 5)
    assert jnp.allclose(out, ref, atol=1e-2, rtol=1e-2), "default [B,5] path mismatch"

    out_ld = jax.block_until_ready(
        phone_recommendation_forward(x_fm, kparams, lane_dense_output=True))
    assert out_ld.shape == (5, B)
    assert jnp.allclose(out_ld.T, ref, atol=1e-2, rtol=1e-2), "lane-dense [5,B] path mismatch"

    # Tiny single-block case (block == full array dims, grid=(1,)).
    B2 = 48
    x2 = jax.random.normal(jax.random.PRNGKey(1), (B2, 3), dtype=jnp.float32)
    out2 = jax.block_until_ready(phone_recommendation_forward(x2.T, kparams))
    ref2 = reference_forward(x2, torch_params)
    assert out2.shape == (B2, 5)
    assert jnp.allclose(out2, ref2, atol=1e-2, rtol=1e-2), "small-batch path mismatch"

    print("KERNEL_OK")
</pallas_src>

<mosaic_0001>
module attributes {stable_mosaic.version = 11 : i64} {
  func.func @mlp_kernel_batch_major_out(%arg0: i32, %arg1: memref<3x128xf32, #tpu.memory_space<vmem>>, %arg2: memref<16x3xf32, #tpu.memory_space<vmem>>, %arg3: memref<16x1xf32, #tpu.memory_space<vmem>>, %arg4: memref<16x16xf32, #tpu.memory_space<vmem>>, %arg5: memref<16x1xf32, #tpu.memory_space<vmem>>, %arg6: memref<5x16xf32, #tpu.memory_space<vmem>>, %arg7: memref<1x5xf32, #tpu.memory_space<vmem>>, %arg8: memref<128x5xf32, #tpu.memory_space<vmem>>) attributes {dimension_semantics = [#tpu.dimension_semantics<parallel>], iteration_bounds = array<i64: 2>, scalar_prefetch = 0 : i64, scratch_operands = 0 : i64, tpu.core_type = #tpu.core_type<tc>, window_params = [{transform_indices = @transform_0, window_bounds = array<i64: 3, 128>}, {pipeline_mode = #tpu.pipeline_mode<synchronous>, transform_indices = @transform_1, window_bounds = array<i64: 16, 3>}, {pipeline_mode = #tpu.pipeline_mode<synchronous>, transform_indices = @transform_2, window_bounds = array<i64: 16, 1>}, {pipeline_mode = #tpu.pipeline_mode<synchronous>, transform_indices = @transform_3, window_bounds = array<i64: 16, 16>}, {pipeline_mode = #tpu.pipeline_mode<synchronous>, transform_indices = @transform_4, window_bounds = array<i64: 16, 1>}, {pipeline_mode = #tpu.pipeline_mode<synchronous>, transform_indices = @transform_5, window_bounds = array<i64: 5, 16>}, {pipeline_mode = #tpu.pipeline_mode<synchronous>, transform_indices = @transform_6, window_bounds = array<i64: 1, 5>}, {transform_indices = @transform_7, window_bounds = array<i64: 128, 5>}]} {
    %c0 = arith.constant 0 : index
    %c0_0 = arith.constant 0 : index
    %0 = vector.load %arg1[%c0, %c0_0] : memref<3x128xf32, #tpu.memory_space<vmem>>, vector<3x128xf32>
    %c0_1 = arith.constant 0 : index
    %c0_2 = arith.constant 0 : index
    %1 = vector.load %arg2[%c0_1, %c0_2] : memref<16x3xf32, #tpu.memory_space<vmem>>, vector<16x3xf32>
    %cst = arith.constant dense<0.000000e+00> : vector<16x128xf32>
    %2 = tpu.matmul %1, %0, %cst {dimension_numbers = #tpu.dot_dimension_numbers<[1], [0], [0], [1], [0, 0, 1, 1], [], []>} : vector<16x3xf32>, vector<3x128xf32>, vector<16x128xf32> -> vector<16x128xf32>
    %c0_3 = arith.constant 0 : index
    %c0_4 = arith.constant 0 : index
    %3 = vector.load %arg3[%c0_3, %c0_4] : memref<16x1xf32, #tpu.memory_space<vmem>>, vector<16x1xf32>
    %4 = vector.broadcast %3 : vector<16x1xf32> to vector<16x128xf32>
    %5 = arith.addf %2, %4 : vector<16x128xf32>
    %cst_5 = arith.constant 0.000000e+00 : f32
    %6 = vector.broadcast %cst_5 : f32 to vector<16x128xf32>
    %7 = arith.maximumf %5, %6 : vector<16x128xf32>
    %c0_6 = arith.constant 0 : index
    %c0_7 = arith.constant 0 : index
    %8 = vector.load %arg4[%c0_6, %c0_7] : memref<16x16xf32, #tpu.memory_space<vmem>>, vector<16x16xf32>
    %cst_8 = arith.constant dense<0.000000e+00> : vector<16x128xf32>
    %9 = tpu.matmul %8, %7, %cst_8 {dimension_numbers = #tpu.dot_dimension_numbers<[1], [0], [0], [1], [0, 0, 1, 1], [], []>} : vector<16x16xf32>, vector<16x128xf32>, vector<16x128xf32> -> vector<16x128xf32>
    %c0_9 = arith.constant 0 : index
    %c0_10 = arith.constant 0 : index
    %10 = vector.load %arg5[%c0_9, %c0_10] : memref<16x1xf32, #tpu.memory_space<vmem>>, vector<16x1xf32>
    %11 = vector.broadcast %10 : vector<16x1xf32> to vector<16x128xf32>
    %12 = arith.addf %9, %11 : vector<16x128xf32>
    %cst_11 = arith.constant 0.000000e+00 : f32
    %13 = vector.broadcast %cst_11 : f32 to vector<16x128xf32>
    %14 = arith.maximumf %12, %13 : vector<16x128xf32>
    %c0_12 = arith.constant 0 : index
    %c0_13 = arith.constant 0 : index
    %15 = vector.load %arg6[%c0_12, %c0_13] : memref<5x16xf32, #tpu.memory_space<vmem>>, vector<5x16xf32>
    %cst_14 = arith.constant dense<0.000000e+00> : vector<128x5xf32>
    %16 = tpu.matmul %14, %15, %cst_14 {dimension_numbers = #tpu.dot_dimension_numbers<[0], [1], [1], [0], [0, 1, 1, 0], [], []>} : vector<16x128xf32>, vector<5x16xf32>, vector<128x5xf32> -> vector<128x5xf32>
    %c0_15 = arith.constant 0 : index
    %c0_16 = arith.constant 0 : index
    %17 = vector.load %arg7[%c0_15, %c0_16] : memref<1x5xf32, #tpu.memory_space<vmem>>, vector<1x5xf32>
    %18 = vector.broadcast %17 : vector<1x5xf32> to vector<128x5xf32>
    %19 = arith.addf %16, %18 : vector<128x5xf32>
    %c0_17 = arith.constant 0 : index
    %c0_18 = arith.constant 0 : index
    %20 = vector.load %arg8[%c0_17, %c0_18] : memref<128x5xf32, #tpu.memory_space<vmem>>, vector<128x5xf32>
    tpu.vector_store %arg8[%c0_17, %c0_18], %19 {strides = array<i32>} : memref<128x5xf32, #tpu.memory_space<vmem>>, vector<128x5xf32>,
    return
  }
  func.func @transform_0(%arg0: i32) -> (i32, i32) {
    %c0_i32 = arith.constant 0 : i32
    %c0_i32_0 = arith.constant 0 : i32
    return %c0_i32, %arg0 : i32, i32
  }
  func.func @transform_1(%arg0: i32) -> (i32, i32) {
    %c0_i32 = arith.constant 0 : i32
    %c0_i32_0 = arith.constant 0 : i32
    %c0_i32_1 = arith.constant 0 : i32
    return %c0_i32, %c0_i32_0 : i32, i32
  }
  func.func @transform_2(%arg0: i32) -> (i32, i32) {
    %c0_i32 = arith.constant 0 : i32
    %c0_i32_0 = arith.constant 0 : i32
    %c0_i32_1 = arith.constant 0 : i32
    return %c0_i32, %c0_i32_0 : i32, i32
  }
  func.func @transform_3(%arg0: i32) -> (i32, i32) {
    %c0_i32 = arith.constant 0 : i32
    %c0_i32_0 = arith.constant 0 : i32
    %c0_i32_1 = arith.constant 0 : i32
    return %c0_i32, %c0_i32_0 : i32, i32
  }
  func.func @transform_4(%arg0: i32) -> (i32, i32) {
    %c0_i32 = arith.constant 0 : i32
    %c0_i32_0 = arith.constant 0 : i32
    %c0_i32_1 = arith.constant 0 : i32
    return %c0_i32, %c0_i32_0 : i32, i32
  }
  func.func @transform_5(%arg0: i32) -> (i32, i32) {
    %c0_i32 = arith.constant 0 : i32
    %c0_i32_0 = arith.constant 0 : i32
    %c0_i32_1 = arith.constant 0 : i32
    return %c0_i32, %c0_i32_0 : i32, i32
  }
  func.func @transform_6(%arg0: i32) -> (i32, i32) {
    %c0_i32 = arith.constant 0 : i32
    %c0_i32_0 = arith.constant 0 : i32
    %c0_i32_1 = arith.constant 0 : i32
    return %c0_i32, %c0_i32_0 : i32, i32
  }
  func.func @transform_7(%arg0: i32) -> (i32, i32) {
    %c0_i32 = arith.constant 0 : i32
    %c0_i32_0 = arith.constant 0 : i32
    return %arg0, %c0_i32 : i32, i32
  }
}

</mosaic_0001>

<llo_original>
// kernel: tpu_custom_call.1
$region0: #{tpu_custom_call.1}
  #allocation0 [shape = 'u32[]', space=smem, size = 0x4, offset = 0x4, fixed_abs, tag = 'smem constant byte address 0x4 - core index']
  #allocation1 [shape = 'u32[144,128]{1,0:T(1,128)}', space=vmem, size = 0x12000, scoped, tag = 'internal scratch']
  %s0 = inlined_call_operand.vmem [shape: f32[3,200], index: 0, kind: input, shape index: {}]
  %s1 = inlined_call_operand.vmem [shape: f32[16,3], index: 1, kind: input, shape index: {}]
  %s2 = inlined_call_operand.vmem [shape: f32[16,1], index: 2, kind: input, shape index: {}]
  %s3 = inlined_call_operand.vmem [shape: f32[16,16], index: 3, kind: input, shape index: {}]
  %s4 = inlined_call_operand.vmem [shape: f32[16,1], index: 4, kind: input, shape index: {}]
  %s5 = inlined_call_operand.vmem [shape: f32[5,16], index: 5, kind: input, shape index: {}]
  %s6 = inlined_call_operand.vmem [shape: f32[1,5], index: 6, kind: input, shape index: {}]
  %s7 = inlined_call_operand.vmem [shape: f32[200,5], index: 7, kind: output, shape index: {}]
  %s8 = sld [smem:[#allocation0]]
  $region109: #{tpu_custom_call.1} parent=0
    _
  %s10 = ssub.s32 1, %s8
  %s11 = scalar_select 0, %s10, %s8
  $region1: #{tpu_custom_call.1} parent=0
    #allocation2 [shape = 'u8[131072]{0}', space=vmem, size = 0x20000, scoped, tag = 'output window, operand 0']
    loop: start=0, step=1, limit=4
    $region2: #{tpu_custom_call.1} parent=1 // loop_pre_header
      _
    $region3: #{tpu_custom_call.1} parent=1 // loop_header
      %s13 = sphi 0, %s17
      %p14 = scmp.ge.s32.totalorder %s13, 4
      %s23 = sphi 0, %s25
      %s26 = sphi 0, %s23
      %s27 = sphi 0, %s26
      %s43 = sphi 0, %s27
      %s47 = sphi 0, %s47
      %s49 = sphi 0, %s47
      %s50 = sphi 0, %s49
      %s64 = sphi 0, %s50
      %s68 = sphi 0, %s68
      %s70 = sphi 0, %s68
      %s71 = sphi 0, %s70
      %s85 = sphi 0, %s71
      %s89 = sphi 0, %s89
      %s91 = sphi 0, %s89
      %s92 = sphi 0, %s91
      %s106 = sphi 0, %s92
      %s110 = sphi 0, %s110
      %s112 = sphi 0, %s110
      %s113 = sphi 0, %s112
      %s127 = sphi 0, %s113
      %s131 = sphi 0, %s131
      %s133 = sphi 0, %s131
      %s134 = sphi 0, %s133
      %s148 = sphi 0, %s134
      %s152 = sphi 0, %s152
      %s154 = sphi 0, %s152
      %s155 = sphi 0, %s154
      %s169 = sphi 0, %s155
      %s175 = sphi 0, %s177
      %s178 = sphi 0, %s175
      %s179 = sphi 0, %s178
      %s195 = sphi 0, %s179
    $region4: #{tpu_custom_call.1} parent=1 // loop_header_branch
      %16 = sbr.rel (%p14) target = $region8
    $region5: #{tpu_custom_call.1} parent=1 // loop_body
      %s18 = ssub.s32 %s13, 1
      %s19 = ssub.s32 %s13, 2
      %s20 = sadd.s32 %s13, 1
      %s21 = ssub.s32 %s13, %s20
      %p22 = scmp.eq.s32.totalorder %s21, 0
      %s24 = sadd.s32 %s23, 1
      %s25 = scalar_select %p22, %s23, %s24
      %p28 = pneg %p22
      %p29 = scmp.eq.s32.totalorder %s13, 1
      %p30 = por %p28, %p29
      %p31 = scmp.ne.s32.totalorder %s23, %s26
      %p32 = scmp.eq.s32.totalorder %s13, 0
      %p33 = por %p31, %p32
      %p34 = scmp.ne.s32.totalorder %s23, %s26
      %p35 = scmp.eq.s32.totalorder %s18, 1
      %p36 = por %p34, %p35
      %p37 = scmp.ne.s32.totalorder %s26, %s27
      %p38 = scmp.eq.s32.totalorder %s18, 0
      %p39 = por %p37, %p38
      %p40 = scmp.ne.s32.totalorder %s26, %s27
      %p41 = scmp.eq.s32.totalorder %s19, 1
      %p42 = por %p40, %p41
      %p44 = scmp.ne.s32.totalorder %s27, %s43
      %p45 = scmp.eq.s32.totalorder %s19, 0
      %p46 = por %p44, %p45
      %s48 = sadd.s32 %s47, 1
      %p51 = scmp.eq.s32.totalorder %s13, 1
      %p52 = scmp.ne.s32.totalorder %s47, %s49
      %p53 = scmp.eq.s32.totalorder %s13, 0
      %p54 = por %p52, %p53
      %p55 = scmp.ne.s32.totalorder %s47, %s49
      %p56 = scmp.eq.s32.totalorder %s18, 1
      %p57 = por %p55, %p56
      %p58 = scmp.ne.s32.totalorder %s49, %s50
      %p59 = scmp.eq.s32.totalorder %s18, 0
      %p60 = por %p58, %p59
      %p61 = scmp.ne.s32.totalorder %s49, %s50
      %p62 = scmp.eq.s32.totalorder %s19, 1
      %p63 = por %p61, %p62
      %p65 = scmp.ne.s32.totalorder %s50, %s64
      %p66 = scmp.eq.s32.totalorder %s19, 0
      %p67 = por %p65, %p66
      %s69 = sadd.s32 %s68, 1
      %p72 = scmp.eq.s32.totalorder %s13, 1
      %p73 = scmp.ne.s32.totalorder %s68, %s70
      %p74 = scmp.eq.s32.totalorder %s13, 0
      %p75 = por %p73, %p74
      %p76 = scmp.ne.s32.totalorder %s68, %s70
      %p77 = scmp.eq.s32.totalorder %s18, 1
      %p78 = por %p76, %p77
      %p79 = scmp.ne.s32.totalorder %s70, %s71
      %p80 = scmp.eq.s32.totalorder %s18, 0
      %p81 = por %p79, %p80
      %p82 = scmp.ne.s32.totalorder %s70, %s71
      %p83 = scmp.eq.s32.totalorder %s19, 1
      %p84 = por %p82, %p83
      %p86 = scmp.ne.s32.totalorder %s71, %s85
      %p87 = scmp.eq.s32.totalorder %s19, 0
      %p88 = por %p86, %p87
      %s90 = sadd.s32 %s89, 1
      %p93 = scmp.eq.s32.totalorder %s13, 1
      %p94 = scmp.ne.s32.totalorder %s89, %s91
      %p95 = scmp.eq.s32.totalorder %s13, 0
      %p96 = por %p94, %p95
      %p97 = scmp.ne.s32.totalorder %s89, %s91
      %p98 = scmp.eq.s32.totalorder %s18, 1
      %p99 = por %p97, %p98
      %p100 = scmp.ne.s32.totalorder %s91, %s92
      %p101 = scmp.eq.s32.totalorder %s18, 0
      %p102 = por %p100, %p101
      %p103 = scmp.ne.s32.totalorder %s91, %s92
      %p104 = scmp.eq.s32.totalorder %s19, 1
      %p105 = por %p103, %p104
      %p107 = scmp.ne.s32.totalorder %s92, %s106
      %p108 = scmp.eq.s32.totalorder %s19, 0
      %p109 = por %p107, %p108
      %s111 = sadd.s32 %s110, 1
      %p114 = scmp.eq.s32.totalorder %s13, 1
      %p115 = scmp.ne.s32.totalorder %s110, %s112
      %p116 = scmp.eq.s32.totalorder %s13, 0
      %p117 = por %p115, %p116
      %p118 = scmp.ne.s32.totalorder %s110, %s112
      %p119 = scmp.eq.s32.totalorder %s18, 1
      %p120 = por %p118, %p119
      %p121 = scmp.ne.s32.totalorder %s112, %s113
      %p122 = scmp.eq.s32.totalorder %s18, 0
      %p123 = por %p121, %p122
      %p124 = scmp.ne.s32.totalorder %s112, %s113
      %p125 = scmp.eq.s32.totalorder %s19, 1
      %p126 = por %p124, %p125
      %p128 = scmp.ne.s32.totalorder %s113, %s127
      %p129 = scmp.eq.s32.totalorder %s19, 0
      %p130 = por %p128, %p129
      %s132 = sadd.s32 %s131, 1
      %p135 = scmp.eq.s32.totalorder %s13, 1
      %p136 = scmp.ne.s32.totalorder %s131, %s133
      %p137 = scmp.eq.s32.totalorder %s13, 0
      %p138 = por %p136, %p137
      %p139 = scmp.ne.s32.totalorder %s131, %s133
      %p140 = scmp.eq.s32.totalorder %s18, 1
      %p141 = por %p139, %p140
      %p142 = scmp.ne.s32.totalorder %s133, %s134
      %p143 = scmp.eq.s32.totalorder %s18, 0
      %p144 = por %p142, %p143
      %p145 = scmp.ne.s32.totalorder %s133, %s134
      %p146 = scmp.eq.s32.totalorder %s19, 1
      %p147 = por %p145, %p146
      %p149 = scmp.ne.s32.totalorder %s134, %s148
      %p150 = scmp.eq.s32.totalorder %s19, 0
      %p151 = por %p149, %p150
      %s153 = sadd.s32 %s152, 1
      %p156 = scmp.eq.s32.totalorder %s13, 1
      %p157 = scmp.ne.s32.totalorder %s152, %s154
      %p158 = scmp.eq.s32.totalorder %s13, 0
      %p159 = por %p157, %p158
      %p160 = scmp.ne.s32.totalorder %s152, %s154
      %p161 = scmp.eq.s32.totalorder %s18, 1
      %p162 = por %p160, %p161
      %p163 = scmp.ne.s32.totalorder %s154, %s155
      %p164 = scmp.eq.s32.totalorder %s18, 0
      %p165 = por %p163, %p164
      %p166 = scmp.ne.s32.totalorder %s154, %s155
      %p167 = scmp.eq.s32.totalorder %s19, 1
      %p168 = por %p166, %p167
      %p170 = scmp.ne.s32.totalorder %s155, %s169
      %p171 = scmp.eq.s32.totalorder %s19, 0
      %p172 = por %p170, %p171
      %s173 = ssub.s32 %s13, %s20
      %p174 = scmp.eq.s32.totalorder %s173, 0
      %s176 = sadd.s32 %s175, 1
      %s177 = scalar_select %p174, %s175, %s176
      %p180 = pneg %p174
      %p181 = scmp.eq.s32.totalorder %s13, 1
      %p182 = por %p180, %p181
      %p183 = scmp.ne.s32.totalorder %s175, %s178
      %p184 = scmp.eq.s32.totalorder %s13, 0
      %p185 = por %p183, %p184
      %p186 = scmp.ne.s32.totalorder %s175, %s178
      %p187 = scmp.eq.s32.totalorder %s18, 1
      %p188 = por %p186, %p187
      %p189 = scmp.ne.s32.totalorder %s178, %s179
      %p190 = scmp.eq.s32.totalorder %s18, 0
      %p191 = por %p189, %p190
      %p192 = scmp.ne.s32.totalorder %s178, %s179
      %p193 = scmp.eq.s32.totalorder %s19, 1
      %p194 = por %p192, %p193
      %p196 = scmp.ne.s32.totalorder %s179, %s195
      %p197 = scmp.eq.s32.totalorder %s19, 0
      %p198 = por %p196, %p197
      %p199 = scmp.le.s32.totalorder 1, %s13
      %p200 = scmp.lt.s32.totalorder %s13, 3
      %p201 = pnand %p199, %p200
      %p202 = pneg %p201
      // Predicated region
      $region9: #{tpu_custom_call.1} parent=5 // pred_check
        _
      $region10: #{tpu_custom_call.1} parent=5 // pred_check_branch
        %204 = sbr.rel (%p201) target = $region12
      $region11: #{tpu_custom_call.1} parent=5 // pred_region
        %s205 = ssub.s32 %s13, 1
        // Predicated region
        $region13: #{tpu_custom_call.1} parent=11 // pred_check
          %p206 = pneg %p60
        $region14: #{tpu_custom_call.1} parent=11 // pred_check_branch
          %208 = sbr.rel (%p206) target = $region16
        $region15: #{tpu_custom_call.1} parent=11 // pred_region
          _
        $region16: #{tpu_custom_call.1} parent=11 // pred_fallthru
          _
        // Predicated region
        $region17: #{tpu_custom_call.1} parent=11 // pred_check
          %p209 = pneg %p81
        $region18: #{tpu_custom_call.1} parent=11 // pred_check_branch
          %211 = sbr.rel (%p209) target = $region20
        $region19: #{tpu_custom_call.1} parent=11 // pred_region
          _
        $region20: #{tpu_custom_call.1} parent=11 // pred_fallthru
          _
        // Predicated region
        $region21: #{tpu_custom_call.1} parent=11 // pred_check
          %p212 = pneg %p102
        $region22: #{tpu_custom_call.1} parent=11 // pred_check_branch
          %214 = sbr.rel (%p212) target = $region24
        $region23: #{tpu_custom_call.1} parent=11 // pred_region
          _
        $region24: #{tpu_custom_call.1} parent=11 // pred_fallthru
          _
        // Predicated region
        $region25: #{tpu_custom_call.1} parent=11 // pred_check
          %p215 = pneg %p123
        $region26: #{tpu_custom_call.1} parent=11 // pred_check_branch
          %217 = sbr.rel (%p215) target = $region28
        $region27: #{tpu_custom_call.1} parent=11 // pred_region
          _
        $region28: #{tpu_custom_call.1} parent=11 // pred_fallthru
          _
        // Predicated region
        $region29: #{tpu_custom_call.1} parent=11 // pred_check
          %p218 = pneg %p144
        $region30: #{tpu_custom_call.1} parent=11 // pred_check_branch
          %220 = sbr.rel (%p218) target = $region32
        $region31: #{tpu_custom_call.1} parent=11 // pred_region
          _
        $region32: #{tpu_custom_call.1} parent=11 // pred_fallthru
          _
        // Predicated region
        $region33: #{tpu_custom_call.1} parent=11 // pred_check
          %p221 = pneg %p165
        $region34: #{tpu_custom_call.1} parent=11 // pred_check_branch
          %223 = sbr.rel (%p221) target = $region36
        $region35: #{tpu_custom_call.1} parent=11 // pred_region
          _
        $region36: #{tpu_custom_call.1} parent=11 // pred_fallthru
          _
      $region12: #{tpu_custom_call.1} parent=5 // pred_fallthru
        _
      %p224 = scmp.lt.s32.totalorder %s13, 2
      // Predicated region
      $region37: #{tpu_custom_call.1} parent=5 // pred_check
        %p225 = pneg %p224
      $region38: #{tpu_custom_call.1} parent=5 // pred_check_branch
        %227 = sbr.rel (%p225) target = $region40
      $region39: #{tpu_custom_call.1} parent=5 // pred_region
        // Predicated region
        $region41: #{tpu_custom_call.1} parent=39 // pred_check
          %p228 = pneg %p33
        $region42: #{tpu_custom_call.1} parent=39 // pred_check_branch
          %230 = sbr.rel (%p228) target = $region44
        $region43: #{tpu_custom_call.1} parent=39 // pred_region
          %p231 = scmp.lt.s32.totalorder %s13, 1
          %s232 = scalar_select %p231, %s13, 1
          %s233 = smul.addr %s232, 4
          %s234 = scalar_lea.vmem %s0, %s233
        $region44: #{tpu_custom_call.1} parent=39 // pred_fallthru
          _
      $region40: #{tpu_custom_call.1} parent=5 // pred_fallthru
        _
      %p235 = scmp.le.s32.totalorder 1, %s13
      %p236 = scmp.lt.s32.totalorder %s13, 3
      %p237 = pnand %p235, %p236
      %p238 = pneg %p237
      // Predicated region
      $region45: #{tpu_custom_call.1} parent=5 // pred_check
        _
      $region46: #{tpu_custom_call.1} parent=5 // pred_check_branch
        %240 = sbr.rel (%p237) target = $region48
      $region47: #{tpu_custom_call.1} parent=5 // pred_region
        %s241 = ssub.s32 %s13, 1
        %p242 = scmp.lt.s32.totalorder %s18, 1
        %s243 = scalar_select %p242, %s18, 1
        %s244 = smul.addr %s243, 4
        %s245 = scalar_lea.vmem %s0, %s244
        %p246 = pneg %p39
        %p247 = pneg %p36
        %p248 = pneg %p60
        %p249 = pneg %p57
        %p250 = pneg %p81
        %p251 = pneg %p78
        %p252 = pneg %p102
        %p253 = pneg %p99
        %p254 = pneg %p123
        %p255 = pneg %p120
        %p256 = pneg %p144
        %p257 = pneg %p141
        %p258 = pneg %p165
        %p259 = pneg %p162
        %p260 = pneg %p191
        %p261 = pneg %p188
        %s262 = sand.u32 %s178, 1
        %s263 = sand.u32 %s178, 1
        %s264 = smul.addr %s263, 128
        %s265 = scalar_lea.vmem [#allocation2], %s264
        %p266 = scmp.lt.s32.totalorder %s18, 1
        %s267 = scalar_select %p266, %s18, 1
        %s268 = smul.addr %s267, 4
        %s269 = scalar_lea.vmem %s0, %s268
        %s270 = smul.u32 16, %s18
        %s271 = ssub.s32 25, %s270
        %p272 = scmp.lt.s32.totalorder %s271, 16
        %s273 = scalar_select %p272, %s271, 16
        %s274 = smul.u32 128, %s273
        %v275 = vld [vmem:[%s269] sm:$0x7]
        %v276 = vld [vmem:[%s1] sm:$0xff]
        %v277 = vld [vmem:[%s1 + $0x8] sm:$0xff]
        %v278 = vld [vmem:[%s2] sm:$0xff]
        %v279 = vld [vmem:[%s2 + $0x8] sm:$0xff]
        %281 = vset.pattern.permute.xlu0 0
        %282 = vperm.xlu0 %281, %v278
        %v283 = vpop.permute.xlu0 %282
        %286 = vset.pattern.permute.xlu0 0
        %287 = vperm.xlu0 %286, %v279
        %v288 = vpop.permute.xlu0 %287
        %vm290 = vcmask 23552
        %v292 = vsel %vm290, %v276, 0
        %v295 = vsel %vm290, %v277, 0
        %vm297 = vcmask 1042432
        %v299 = vsel %vm297, %v275, 0
        %301 = vmatprep.subr.mxu0 0.0
        %302 = vmatpush1.msra.mxu0 0.0
        %303 = vmatprep.subr.mxu0 0.0
        %304 = vmatpush1.msra.mxu0 0.0
        %305 = vmatprep.subr.mxu0 0.0
        %306 = vmatpush1.msra.mxu0 0.0
        %307 = vmatprep.subr.mxu0 0.0
        %308 = vmatpush1.msra.mxu0 0.0
        %309 = vmatprep.subr.mxu0 0.0
        %310 = vmatpush1.msra.mxu0 0.0
        %311 = vmatprep.subr.mxu0 0.0
        %312 = vmatpush1.msra.mxu0 0.0
        %313 = vmatprep.subr.mxu0 0.0
        %314 = vmatpush1.msra.mxu0 0.0
        %315 = vmatprep.subr.mxu0 0.0
        %316 = vmatpush1.msra.mxu0 0.0
        %317 = vmatprep.subr.mxu0 0.0
        %318 = vmatpush1.msra.mxu0 0.0
        %319 = vmatprep.subr.mxu0 0.0
        %320 = vmatpush1.msra.mxu0 0.0
        %321 = vmatprep.subr.mxu0 0.0
        %322 = vmatpush1.msra.mxu0 0.0
        %323 = vmatprep.subr.mxu0 0.0
        %324 = vmatpush1.msra.mxu0 0.0
        %325 = vmatprep.subr.mxu0 0.0
        %326 = vmatpush1.msra.mxu0 0.0
        %327 = vmatprep.subr.mxu0 0.0
        %328 = vmatpush1.msra.mxu0 0.0
        %329 = vmatprep.subr.mxu0 0.0
        %330 = vmatpush1.msra.mxu0 0.0
        %331 = vmatprep.subr.mxu0 0.0
        %332 = vmatpush1.msra.mxu0 %v299
        %333 = vmatprep.subr.mxu0 0.0
        %334 = vmatpush2.msra.mxu0 0.0
        %335 = vmatprep.subr.mxu0 0.0
        %336 = vmatpush2.msra.mxu0 0.0
        %337 = vmatprep.subr.mxu0 0.0
        %338 = vmatpush2.msra.mxu0 0.0
        %339 = vmatprep.subr.mxu0 0.0
        %340 = vmatpush2.msra.mxu0 0.0
        %341 = vmatprep.subr.mxu0 0.0
        %342 = vmatpush2.msra.mxu0 0.0
        %343 = vmatprep.subr.mxu0 0.0
        %344 = vmatpush2.msra.mxu0 0.0
        %345 = vmatprep.subr.mxu0 0.0
        %346 = vmatpush2.msra.mxu0 0.0
        %347 = vmatprep.subr.mxu0 0.0
        %348 = vmatpush2.msra.mxu0 0.0
        %349 = vmatprep.subr.mxu0 0.0
        %350 = vmatpush2.msra.mxu0 0.0
        %351 = vmatprep.subr.mxu0 0.0
        %352 = vmatpush2.msra.mxu0 0.0
        %353 = vmatprep.subr.mxu0 0.0
        %354 = vmatpush2.msra.mxu0 0.0
        %355 = vmatprep.subr.mxu0 0.0
        %356 = vmatpush2.msra.mxu0 0.0
        %357 = vmatprep.subr.mxu0 0.0
        %358 = vmatpush2.msra.mxu0 0.0
        %359 = vmatprep.subr.mxu0 0.0
        %360 = vmatpush2.msra.mxu0 0.0
        %361 = vmatprep.subr.mxu0 0.0
        %362 = vmatpush2.msra.mxu0 0.0
        %363 = vmatprep.subr.mxu0 0.0
        %364 = vmatpush2.msra.mxu0 0.0
        %365 = vmatprep.mubr.f32.mxu0 0.0
        %366 = vmatmul.mubr.f32.gmra.mxu0 %v292
        %v367 = vpop.f32.mrf.mxu0
        %v368 = vadd.f32 %v283, %v367
        %v369 = vpop.f32.mrf.mxu0
        %370 = vmatprep.mubr.f32.mxu0 0.0
        %371 = vmatmul.mubr.f32.gmra.mxu0 %v295
        %v372 = vpop.f32.mrf.mxu0
        %v373 = vadd.f32 %v288, %v372
        %v374 = vpop.f32.mrf.mxu0
        %375 = vdwg.mxu0
        %v376 = vmax.f32 %v368, 0.0
        %v377 = vmax.f32 %v373, 0.0
        %v378 = vld [vmem:[%s3] sm:$0xff]
        %v379 = vld [vmem:[%s3 + $0x8] sm:$0xff]
        %v380 = vld [vmem:[%s4] sm:$0xff]
        %v381 = vld [vmem:[%s4 + $0x8] sm:$0xff]
        %383 = vset.pattern.permute.xlu0 0
        %384 = vperm.xlu0 %383, %v380
        %v385 = vpop.permute.xlu0 %384
        %388 = vset.pattern.permute.xlu0 0
        %389 = vperm.xlu0 %388, %v381
        %v390 = vpop.permute.xlu0 %389
        %vm392 = vcmask 130048
        %v394 = vsel %vm392, %v378, 0
        %v397 = vsel %vm392, %v379, 0
        %399 = vmatprep.subr.mxu0 0.0
        %400 = vmatpush1.msra.mxu0 0.0
        %401 = vmatprep.subr.mxu0 0.0
        %402 = vmatpush1.msra.mxu0 0.0
        %403 = vmatprep.subr.mxu0 0.0
        %404 = vmatpush1.msra.mxu0 0.0
        %405 = vmatprep.subr.mxu0 0.0
        %406 = vmatpush1.msra.mxu0 0.0
        %407 = vmatprep.subr.mxu0 0.0
        %408 = vmatpush1.msra.mxu0 0.0
        %409 = vmatprep.subr.mxu0 0.0
        %410 = vmatpush1.msra.mxu0 0.0
        %411 = vmatprep.subr.mxu0 0.0
        %412 = vmatpush1.msra.mxu0 0.0
        %413 = vmatprep.subr.mxu0 0.0
        %414 = vmatpush1.msra.mxu0 0.0
        %415 = vmatprep.subr.mxu0 0.0
        %416 = vmatpush1.msra.mxu0 0.0
        %417 = vmatprep.subr.mxu0 0.0
        %418 = vmatpush1.msra.mxu0 0.0
        %419 = vmatprep.subr.mxu0 0.0
        %420 = vmatpush1.msra.mxu0 0.0
        %421 = vmatprep.subr.mxu0 0.0
        %422 = vmatpush1.msra.mxu0 0.0
        %423 = vmatprep.subr.mxu0 0.0
        %424 = vmatpush1.msra.mxu0 0.0
        %425 = vmatprep.subr.mxu0 0.0
        %426 = vmatpush1.msra.mxu0 0.0
        %427 = vmatprep.subr.mxu0 0.0
        %428 = vmatpush1.msra.mxu0 %v377
        %429 = vmatprep.subr.mxu0 0.0
        %430 = vmatpush1.msra.mxu0 %v376
        %431 = vmatprep.subr.mxu0 0.0
        %432 = vmatpush2.msra.mxu0 0.0
        %433 = vmatprep.subr.mxu0 0.0
        %434 = vmatpush2.msra.mxu0 0.0
        %435 = vmatprep.subr.mxu0 0.0
        %436 = vmatpush2.msra.mxu0 0.0
        %437 = vmatprep.subr.mxu0 0.0
        %438 = vmatpush2.msra.mxu0 0.0
        %439 = vmatprep.subr.mxu0 0.0
        %440 = vmatpush2.msra.mxu0 0.0
        %441 = vmatprep.subr.mxu0 0.0
        %442 = vmatpush2.msra.mxu0 0.0
        %443 = vmatprep.subr.mxu0 0.0
        %444 = vmatpush2.msra.mxu0 0.0
        %445 = vmatprep.subr.mxu0 0.0
        %446 = vmatpush2.msra.mxu0 0.0
        %447 = vmatprep.subr.mxu0 0.0
        %448 = vmatpush2.msra.mxu0 0.0
        %449 = vmatprep.subr.mxu0 0.0
        %450 = vmatpush2.msra.mxu0 0.0
        %451 = vmatprep.subr.mxu0 0.0
        %452 = vmatpush2.msra.mxu0 0.0
        %453 = vmatprep.subr.mxu0 0.0
        %454 = vmatpush2.msra.mxu0 0.0
        %455 = vmatprep.subr.mxu0 0.0
        %456 = vmatpush2.msra.mxu0 0.0
        %457 = vmatprep.subr.mxu0 0.0
        %458 = vmatpush2.msra.mxu0 0.0
        %459 = vmatprep.subr.mxu0 0.0
        %460 = vmatpush2.msra.mxu0 0.0
        %461 = vmatprep.subr.mxu0 0.0
        %462 = vmatpush2.msra.mxu0 0.0
        %463 = vmatprep.mubr.f32.mxu0 0.0
        %464 = vmatmul.mubr.f32.gmra.mxu0 %v394
        %v465 = vpop.f32.mrf.mxu0
        %v466 = vadd.f32 %v385, %v465
        %v467 = vpop.f32.mrf.mxu0
        %468 = vmatprep.mubr.f32.mxu0 0.0
        %469 = vmatmul.mubr.f32.gmra.mxu0 %v397
        %v470 = vpop.f32.mrf.mxu0
        %v471 = vadd.f32 %v390, %v470
        %v472 = vpop.f32.mrf.mxu0
        %473 = vdwg.mxu0
        %v474 = vmax.f32 %v466, 0.0
        %v475 = vmax.f32 %v471, 0.0
        %v476 = vld [vmem:[%s5] sm:$0x1f]
        %v477 = vld [vmem:[%s6] sm:$0x1]
        %v479 = vlaneseq
        %v480 = vshrl.u32 %v479, 7
        %v481 = vsub.s32 0, %v480
        %v482 = vrot.slane %v477, %v481
        %484 = vxpose.xlu0.b32.start [1/16] %v474, 128
        %485 = vxpose.xlu0.b32.cont [2/16] %v475, 128
        %486 = vxpose.xlu0.b32.cont [3/16] 0.0, 128
        %487 = vxpose.xlu0.b32.cont [4/16] 0.0, 128
        %488 = vxpose.xlu0.b32.cont [5/16] 0.0, 128
        %489 = vxpose.xlu0.b32.cont [6/16] 0.0, 128
        %490 = vxpose.xlu0.b32.cont [7/16] 0.0, 128
        %491 = vxpose.xlu0.b32.cont [8/16] 0.0, 128
        %492 = vxpose.xlu0.b32.cont [9/16] 0.0, 128
        %493 = vxpose.xlu0.b32.cont [10/16] 0.0, 128
        %494 = vxpose.xlu0.b32.cont [11/16] 0.0, 128
        %495 = vxpose.xlu0.b32.cont [12/16] 0.0, 128
        %496 = vxpose.xlu0.b32.cont [13/16] 0.0, 128
        %497 = vxpose.xlu0.b32.cont [14/16] 0.0, 128
        %498 = vxpose.xlu0.b32.cont [15/16] 0.0, 128
        %499 = vxpose.xlu0.b32.end [16/16] 0.0, 128
        %v500 = vpop.trf.xlu0
        %v501 = vpop.trf.xlu0
        %v502 = vpop.trf.xlu0
        %v503 = vpop.trf.xlu0
        %v504 = vpop.trf.xlu0
        %v505 = vpop.trf.xlu0
        %v506 = vpop.trf.xlu0
        %v507 = vpop.trf.xlu0
        %v508 = vpop.trf.xlu0
        %v509 = vpop.trf.xlu0
        %v510 = vpop.trf.xlu0
        %v511 = vpop.trf.xlu0
        %v512 = vpop.trf.xlu0
        %v513 = vpop.trf.xlu0
        %v514 = vpop.trf.xlu0
        %v515 = vpop.trf.xlu0
        %v517 = vsel %vm392, %v500, 0
        %v520 = vsel %vm392, %v501, 0
        %v523 = vsel %vm392, %v502, 0
        %v526 = vsel %vm392, %v503, 0
        %v529 = vsel %vm392, %v504, 0
        %v532 = vsel %vm392, %v505, 0
        %v535 = vsel %vm392, %v506, 0
        %v538 = vsel %vm392, %v507, 0
        %v541 = vsel %vm392, %v508, 0
        %v544 = vsel %vm392, %v509, 0
        %v547 = vsel %vm392, %v510, 0
        %v550 = vsel %vm392, %v511, 0
        %v553 = vsel %vm392, %v512, 0
        %v556 = vsel %vm392, %v513, 0
        %v559 = vsel %vm392, %v514, 0
        %v562 = vsel %vm392, %v515, 0
        %v565 = vsel %vm392, %v476, 0
        %567 = vmatprep.subr.mxu0 0.0
        %568 = vmatpush1.xpose.msra.mxu0 0.0
        %569 = vmatprep.subr.mxu0 0.0
        %570 = vmatpush1.xpose.msra.mxu0 0.0
        %571 = vmatprep.subr.mxu0 0.0
        %572 = vmatpush1.xpose.msra.mxu0 0.0
        %573 = vmatprep.subr.mxu0 0.0
        %574 = vmatpush1.xpose.msra.mxu0 0.0
        %575 = vmatprep.subr.mxu0 0.0
        %576 = vmatpush1.xpose.msra.mxu0 0.0
        %577 = vmatprep.subr.mxu0 0.0
        %578 = vmatpush1.xpose.msra.mxu0 0.0
        %579 = vmatprep.subr.mxu0 0.0
        %580 = vmatpush1.xpose.msra.mxu0 0.0
        %581 = vmatprep.subr.mxu0 0.0
        %582 = vmatpush1.xpose.msra.mxu0 0.0
        %583 = vmatprep.subr.mxu0 0.0
        %584 = vmatpush1.xpose.msra.mxu0 0.0
        %585 = vmatprep.subr.mxu0 0.0
        %586 = vmatpush1.xpose.msra.mxu0 0.0
        %587 = vmatprep.subr.mxu0 0.0
        %588 = vmatpush1.xpose.msra.mxu0 0.0
        %589 = vmatprep.subr.mxu0 0.0
        %590 = vmatpush1.xpose.msra.mxu0 0.0
        %591 = vmatprep.subr.mxu0 0.0
        %592 = vmatpush1.xpose.msra.mxu0 0.0
        %593 = vmatprep.subr.mxu0 0.0
        %594 = vmatpush1.xpose.msra.mxu0 0.0
        %595 = vmatprep.subr.mxu0 0.0
        %596 = vmatpush1.xpose.msra.mxu0 0.0
        %597 = vmatprep.subr.mxu0 0.0
        %598 = vmatpush1.xpose.msra.mxu0 %v565
        %599 = vmatprep.subr.mxu0 0.0
        %600 = vmatpush2.xpose.msra.mxu0 0.0
        %601 = vmatprep.subr.mxu0 0.0
        %602 = vmatpush2.xpose.msra.mxu0 0.0
        %603 = vmatprep.subr.mxu0 0.0
        %604 = vmatpush2.xpose.msra.mxu0 0.0
        %605 = vmatprep.subr.mxu0 0.0
        %606 = vmatpush2.xpose.msra.mxu0 0.0
        %607 = vmatprep.subr.mxu0 0.0
        %608 = vmatpush2.xpose.msra.mxu0 0.0
        %609 = vmatprep.subr.mxu0 0.0
        %610 = vmatpush2.xpose.msra.mxu0 0.0
        %611 = vmatprep.subr.mxu0 0.0
        %612 = vmatpush2.xpose.msra.mxu0 0.0
        %613 = vmatprep.subr.mxu0 0.0
        %614 = vmatpush2.xpose.msra.mxu0 0.0
        %615 = vmatprep.subr.mxu0 0.0
        %616 = vmatpush2.xpose.msra.mxu0 0.0
        %617 = vmatprep.subr.mxu0 0.0
        %618 = vmatpush2.xpose.msra.mxu0 0.0
        %619 = vmatprep.subr.mxu0 0.0
        %620 = vmatpush2.xpose.msra.mxu0 0.0
        %621 = vmatprep.subr.mxu0 0.0
        %622 = vmatpush2.xpose.msra.mxu0 0.0
        %623 = vmatprep.subr.mxu0 0.0
        %624 = vmatpush2.xpose.msra.mxu0 0.0
        %625 = vmatprep.subr.mxu0 0.0
        %626 = vmatpush2.xpose.msra.mxu0 0.0
        %627 = vmatprep.subr.mxu0 0.0
        %628 = vmatpush2.xpose.msra.mxu0 0.0
        %629 = vmatprep.subr.mxu0 0.0
        %630 = vmatpush2.xpose.msra.mxu0 0.0
        %631 = vmatprep.mubr.f32.mxu0 0.0
        %632 = vmatmul.mubr.f32.gmra.mxu0 %v517
        %v633 = vpop.f32.mrf.mxu0
        %v634 = vadd.f32 %v482, %v633
        %v635 = vpop.f32.mrf.mxu0
        %636 = vmatprep.mubr.f32.mxu0 0.0
        %637 = vmatmul.mubr.f32.gmra.mxu0 %v520
        %v638 = vpop.f32.mrf.mxu0
        %v639 = vadd.f32 %v482, %v638
        %v640 = vpop.f32.mrf.mxu0
        %641 = vmatprep.mubr.f32.mxu0 0.0
        %642 = vmatmul.mubr.f32.gmra.mxu0 %v523
        %v643 = vpop.f32.mrf.mxu0
        %v644 = vadd.f32 %v482, %v643
        %v645 = vpop.f32.mrf.mxu0
        %646 = vmatprep.mubr.f32.mxu0 0.0
        %647 = vmatmul.mubr.f32.gmra.mxu0 %v526
        %v648 = vpop.f32.mrf.mxu0
        %v649 = vadd.f32 %v482, %v648
        %v650 = vpop.f32.mrf.mxu0
        %651 = vmatprep.mubr.f32.mxu0 0.0
        %652 = vmatmul.mubr.f32.gmra.mxu0 %v529
        %v653 = vpop.f32.mrf.mxu0
        %v654 = vadd.f32 %v482, %v653
        %v655 = vpop.f32.mrf.mxu0
        %656 = vmatprep.mubr.f32.mxu0 0.0
        %657 = vmatmul.mubr.f32.gmra.mxu0 %v532
        %v658 = vpop.f32.mrf.mxu0
        %v659 = vadd.f32 %v482, %v658
        %v660 = vpop.f32.mrf.mxu0
        %661 = vmatprep.mubr.f32.mxu0 0.0
        %662 = vmatmul.mubr.f32.gmra.mxu0 %v535
        %v663 = vpop.f32.mrf.mxu0
        %v664 = vadd.f32 %v482, %v663
        %v665 = vpop.f32.mrf.mxu0
        %666 = vmatprep.mubr.f32.mxu0 0.0
        %667 = vmatmul.mubr.f32.gmra.mxu0 %v538
        %v668 = vpop.f32.mrf.mxu0
        %v669 = vadd.f32 %v482, %v668
        %v670 = vpop.f32.mrf.mxu0
        %671 = vmatprep.mubr.f32.mxu0 0.0
        %672 = vmatmul.mubr.f32.gmra.mxu0 %v541
        %v673 = vpop.f32.mrf.mxu0
        %v674 = vadd.f32 %v482, %v673
        %v675 = vpop.f32.mrf.mxu0
        %676 = vmatprep.mubr.f32.mxu0 0.0
        %677 = vmatmul.mubr.f32.gmra.mxu0 %v544
        %v678 = vpop.f32.mrf.mxu0
        %v679 = vadd.f32 %v482, %v678
        %v680 = vpop.f32.mrf.mxu0
        %681 = vmatprep.mubr.f32.mxu0 0.0
        %682 = vmatmul.mubr.f32.gmra.mxu0 %v547
        %v683 = vpop.f32.mrf.mxu0
        %v684 = vadd.f32 %v482, %v683
        %v685 = vpop.f32.mrf.mxu0
        %686 = vmatprep.mubr.f32.mxu0 0.0
        %687 = vmatmul.mubr.f32.gmra.mxu0 %v550
        %v688 = vpop.f32.mrf.mxu0
        %v689 = vadd.f32 %v482, %v688
        %v690 = vpop.f32.mrf.mxu0
        %691 = vmatprep.mubr.f32.mxu0 0.0
        %692 = vmatmul.mubr.f32.gmra.mxu0 %v553
        %v693 = vpop.f32.mrf.mxu0
        %v694 = vadd.f32 %v482, %v693
        %v695 = vpop.f32.mrf.mxu0
        %696 = vmatprep.mubr.f32.mxu0 0.0
        %697 = vmatmul.mubr.f32.gmra.mxu0 %v556
        %v698 = vpop.f32.mrf.mxu0
        %v699 = vadd.f32 %v482, %v698
        %v700 = vpop.f32.mrf.mxu0
        %701 = vmatprep.mubr.f32.mxu0 0.0
        %702 = vmatmul.mubr.f32.gmra.mxu0 %v559
        %v703 = vpop.f32.mrf.mxu0
        %v704 = vadd.f32 %v482, %v703
        %v705 = vpop.f32.mrf.mxu0
        %706 = vmatprep.mubr.f32.mxu0 0.0
        %707 = vmatmul.mubr.f32.gmra.mxu0 %v562
        %v708 = vpop.f32.mrf.mxu0
        %v709 = vadd.f32 %v482, %v708
        %v710 = vpop.f32.mrf.mxu0
        %711 = vdwg.mxu0
        %vm712 = vcmask 39936
        %713 = vst.msk [vmem:[%s265] sm:$0xff] %vm712, %v634
        %714 = vst.msk [vmem:[%s265 + $0x8] sm:$0xff] %vm712, %v639
        %715 = vst.msk [vmem:[%s265 + $0x10] sm:$0xff] %vm712, %v644
        %716 = vst.msk [vmem:[%s265 + $0x18] sm:$0xff] %vm712, %v649
        %717 = vst.msk [vmem:[%s265 + $0x20] sm:$0xff] %vm712, %v654
        %718 = vst.msk [vmem:[%s265 + $0x28] sm:$0xff] %vm712, %v659
        %719 = vst.msk [vmem:[%s265 + $0x30] sm:$0xff] %vm712, %v664
        %720 = vst.msk [vmem:[%s265 + $0x38] sm:$0xff] %vm712, %v669
        %721 = vst.msk [vmem:[%s265 + $0x40] sm:$0xff] %vm712, %v674
        %722 = vst.msk [vmem:[%s265 + $0x48] sm:$0xff] %vm712, %v679
        %723 = vst.msk [vmem:[%s265 + $0x50] sm:$0xff] %vm712, %v684
        %724 = vst.msk [vmem:[%s265 + $0x58] sm:$0xff] %vm712, %v689
        %725 = vst.msk [vmem:[%s265 + $0x60] sm:$0xff] %vm712, %v694
        %726 = vst.msk [vmem:[%s265 + $0x68] sm:$0xff] %vm712, %v699
        %727 = vst.msk [vmem:[%s265 + $0x70] sm:$0xff] %vm712, %v704
        %728 = vst.msk [vmem:[%s265 + $0x78] sm:$0xff] %vm712, %v709
        %s729 = sand.u32 %s178, 1
        %s730 = sand.u32 %s178, 1
        %s731 = smul.addr %s730, 128
        %s732 = scalar_lea.vmem [#allocation2], %s731
        // Predicated region
        $region49: #{tpu_custom_call.1} parent=47 // pred_check
          %p733 = pneg %p188
        $region50: #{tpu_custom_call.1} parent=47 // pred_check_branch
          %735 = sbr.rel (%p733) target = $region52
        $region51: #{tpu_custom_call.1} parent=47 // pred_region
          %s736 = smul.u32 16, %s18
          %s737 = ssub.s32 25, %s736
          %p738 = scmp.lt.s32.totalorder %s737, 16
          %s739 = scalar_select %p738, %s737, 16
          %s740 = smul.u32 128, %s739
          %p741 = scmp.ne.s32.totalorder 0, %s740
          %s742 = smul.addr %s736, 8
          %s743 = scalar_lea.vmem %s7, %s742
          // Predicated region
          $region53: #{tpu_custom_call.1} parent=51 // pred_check
            %p744 = pneg %p741
          $region54: #{tpu_custom_call.1} parent=51 // pred_check_branch
            %746 = sbr.rel (%p744) target = $region56
          $region55: #{tpu_custom_call.1} parent=51 // pred_region
            // Predicated region
            $region57: #{tpu_custom_call.1} parent=55 // pred_check
              _
            $region58: #{tpu_custom_call.1} parent=55 // pred_check_branch
              %748 = sbr.rel (0) target = $region60
            $region59: #{tpu_custom_call.1} parent=55 // pred_region
              // Predicated region
              $region79: #{tpu_custom_call.1} parent=59 // pred_check
                _
              $region80: #{tpu_custom_call.1} parent=59 // pred_check_branch
                %828 = sbr.rel (0) target = $region82
              $region81: #{tpu_custom_call.1} parent=59 // pred_region
                %s829 = sshrl.u32 %s739, 4
                // While loop
                $region83: #{tpu_custom_call.1} parent=81 // loop_pre_header
                  _
                $region84: #{tpu_custom_call.1} parent=81 // loop_header
                  %s831 = sphi 0, %s833
                  %p832 = scmp.ge.s32.totalorder %s831, %s829
                  %s836 = sphi 0, %s873
                  %s837 = sphi %s732, %s876
                  %s838 = sphi %s743, %s877
                $region85: #{tpu_custom_call.1} parent=81 // loop_header_branch
                  %835 = sbr.rel (%p832) target = $region89
                $region86: #{tpu_custom_call.1} parent=81 // loop_body
                  %v839 = vld [vmem:[%s837] sm:$0xff]
                  %840 = vst [vmem:[%s838] sm:$0xff] %v839
                  %v841 = vld [vmem:[%s837 + $0x8] sm:$0xff]
                  %842 = vst [vmem:[%s838 + $0x8] sm:$0xff] %v841
                  %v843 = vld [vmem:[%s837 + $0x10] sm:$0xff]
                  %844 = vst [vmem:[%s838 + $0x10] sm:$0xff] %v843
                  %v845 = vld [vmem:[%s837 + $0x18] sm:$0xff]
                  %846 = vst [vmem:[%s838 + $0x18] sm:$0xff] %v845
                  %v847 = vld [vmem:[%s837 + $0x20] sm:$0xff]
                  %848 = vst [vmem:[%s838 + $0x20] sm:$0xff] %v847
                  %v849 = vld [vmem:[%s837 + $0x28] sm:$0xff]
                  %850 = vst [vmem:[%s838 + $0x28] sm:$0xff] %v849
                  %v851 = vld [vmem:[%s837 + $0x30] sm:$0xff]
                  %852 = vst [vmem:[%s838 + $0x30] sm:$0xff] %v851
                  %v853 = vld [vmem:[%s837 + $0x38] sm:$0xff]
                  %854 = vst [vmem:[%s838 + $0x38] sm:$0xff] %v853
                  %v855 = vld [vmem:[%s837 + $0x40] sm:$0xff]
                  %856 = vst [vmem:[%s838 + $0x40] sm:$0xff] %v855
                  %v857 = vld [vmem:[%s837 + $0x48] sm:$0xff]
                  %858 = vst [vmem:[%s838 + $0x48] sm:$0xff] %v857
                  %v859 = vld [vmem:[%s837 + $0x50] sm:$0xff]
                  %860 = vst [vmem:[%s838 + $0x50] sm:$0xff] %v859
                  %v861 = vld [vmem:[%s837 + $0x58] sm:$0xff]
                  %862 = vst [vmem:[%s838 + $0x58] sm:$0xff] %v861
                  %v863 = vld [vmem:[%s837 + $0x60] sm:$0xff]
                  %864 = vst [vmem:[%s838 + $0x60] sm:$0xff] %v863
                  %v865 = vld [vmem:[%s837 + $0x68] sm:$0xff]
                  %866 = vst [vmem:[%s838 + $0x68] sm:$0xff] %v865
                  %v867 = vld [vmem:[%s837 + $0x70] sm:$0xff]
                  %868 = vst [vmem:[%s838 + $0x70] sm:$0xff] %v867
                  %v869 = vld [vmem:[%s837 + $0x78] sm:$0xff]
                  %870 = vst [vmem:[%s838 + $0x78] sm:$0xff] %v869
                  %s871 = sadd.s32 1, %s836
                  %p872 = scmp.ge.s32.totalorder %s871, %s829
                  %s873 = scalar_select %p872, 0, %s871
                  %s874 = smul.u32 %s873, 128
                  %s875 = smul.u32 %s873, 128
                  %s876 = scalar_lea.vmem %s732, %s874 [#allocation2]
                  %s877 = scalar_lea.vmem %s743, %s875
                $region87: #{tpu_custom_call.1} parent=81 // loop_footer
                  %s833 = sadd.s32 %s831, 1
                $region88: #{tpu_custom_call.1} parent=81 // loop_footer_branch
                  %830 = sbr.rel target = $region84
                $region89: #{tpu_custom_call.1} parent=81 // loop_exit
                  _
                %s878 = sshrl.u32 %s739, 4
                %s879 = sand.u32 %s739, 15
                %s880 = smul.u32 %s878, 16
                %s881 = smul.u32 8, %s880
                %s882 = scalar_lea.vmem %s732, %s881 [#allocation2]
                %s883 = smul.u32 8, %s880
                %s884 = scalar_lea.vmem %s743, %s883
                // While loop
                $region90: #{tpu_custom_call.1} parent=81 // loop_pre_header
                  _
                $region91: #{tpu_custom_call.1} parent=81 // loop_header
                  %s886 = sphi 0, %s888
                  %p887 = scmp.ge.s32.totalorder %s886, %s879
                  %s891 = sphi 0, %s898
                  %s892 = sphi %s882, %s901
                  %s893 = sphi %s884, %s902
                $region92: #{tpu_custom_call.1} parent=81 // loop_header_branch
                  %890 = sbr.rel (%p887) target = $region96
                $region93: #{tpu_custom_call.1} parent=81 // loop_body
                  %v894 = vld [vmem:[%s892] sm:$0xff]
                  %895 = vst [vmem:[%s893] sm:$0xff] %v894
                  %s896 = sadd.s32 1, %s891
                  %p897 = scmp.ge.s32.totalorder %s896, %s879
                  %s898 = scalar_select %p897, 0, %s896
                  %s899 = smul.u32 %s898, 8
                  %s900 = smul.u32 %s898, 8
                  %s901 = scalar_lea.vmem %s882, %s899 [#allocation2]
                  %s902 = scalar_lea.vmem %s884, %s900
                $region94: #{tpu_custom_call.1} parent=81 // loop_footer
                  %s888 = sadd.s32 %s886, 1
                $region95: #{tpu_custom_call.1} parent=81 // loop_footer_branch
                  %885 = sbr.rel target = $region91
                $region96: #{tpu_custom_call.1} parent=81 // loop_exit
                  _
              $region82: #{tpu_custom_call.1} parent=59 // pred_fallthru
                _
              // Predicated region
              $region97: #{tpu_custom_call.1} parent=59 // pred_check
                _
              $region98: #{tpu_custom_call.1} parent=59 // pred_check_branch
                %904 = sbr.rel target = $region100
              $region99: #{tpu_custom_call.1} parent=59 // pred_region
                _
              $region100: #{tpu_custom_call.1} parent=59 // pred_fallthru
                _
            $region60: #{tpu_custom_call.1} parent=55 // pred_fallthru
              _
            // Predicated region
            $region61: #{tpu_custom_call.1} parent=55 // pred_check
              _
            $region62: #{tpu_custom_call.1} parent=55 // pred_check_branch
              %750 = sbr.rel target = $region64
            $region63: #{tpu_custom_call.1} parent=55 // pred_region
              %s752 = ssub.s32 256, 1
              %s753 = sshrl.u32 %s739, 4
              // While loop
              $region65: #{tpu_custom_call.1} parent=63 // loop_pre_header
                _
              $region66: #{tpu_custom_call.1} parent=63 // loop_header
                %s755 = sphi 0, %s757
                %p756 = scmp.ge.s32.totalorder %s755, %s753
                %s760 = sphi 0, %s797
                %s761 = sphi %s732, %s800
                %s762 = sphi %s743, %s801
              $region67: #{tpu_custom_call.1} parent=63 // loop_header_branch
                %759 = sbr.rel (%p756) target = $region71
              $region68: #{tpu_custom_call.1} parent=63 // loop_body
                %v763 = vld [vmem:[%s761] sm:%s752]
                %764 = vst [vmem:[%s762] sm:%s752] %v763
                %v765 = vld [vmem:[%s761 + $0x8] sm:%s752]
                %766 = vst [vmem:[%s762 + $0x8] sm:%s752] %v765
                %v767 = vld [vmem:[%s761 + $0x10] sm:%s752]
                %768 = vst [vmem:[%s762 + $0x10] sm:%s752] %v767
                %v769 = vld [vmem:[%s761 + $0x18] sm:%s752]
                %770 = vst [vmem:[%s762 + $0x18] sm:%s752] %v769
                %v771 = vld [vmem:[%s761 + $0x20] sm:%s752]
                %772 = vst [vmem:[%s762 + $0x20] sm:%s752] %v771
                %v773 = vld [vmem:[%s761 + $0x28] sm:%s752]
                %774 = vst [vmem:[%s762 + $0x28] sm:%s752] %v773
                %v775 = vld [vmem:[%s761 + $0x30] sm:%s752]
                %776 = vst [vmem:[%s762 + $0x30] sm:%s752] %v775
                %v777 = vld [vmem:[%s761 + $0x38] sm:%s752]
                %778 = vst [vmem:[%s762 + $0x38] sm:%s752] %v777
                %v779 = vld [vmem:[%s761 + $0x40] sm:%s752]
                %780 = vst [vmem:[%s762 + $0x40] sm:%s752] %v779
                %v781 = vld [vmem:[%s761 + $0x48] sm:%s752]
                %782 = vst [vmem:[%s762 + $0x48] sm:%s752] %v781
                %v783 = vld [vmem:[%s761 + $0x50] sm:%s752]
                %784 = vst [vmem:[%s762 + $0x50] sm:%s752] %v783
                %v785 = vld [vmem:[%s761 + $0x58] sm:%s752]
                %786 = vst [vmem:[%s762 + $0x58] sm:%s752] %v785
                %v787 = vld [vmem:[%s761 + $0x60] sm:%s752]
                %788 = vst [vmem:[%s762 + $0x60] sm:%s752] %v787
                %v789 = vld [vmem:[%s761 + $0x68] sm:%s752]
                %790 = vst [vmem:[%s762 + $0x68] sm:%s752] %v789
                %v791 = vld [vmem:[%s761 + $0x70] sm:%s752]
                %792 = vst [vmem:[%s762 + $0x70] sm:%s752] %v791
                %v793 = vld [vmem:[%s761 + $0x78] sm:%s752]
                %794 = vst [vmem:[%s762 + $0x78] sm:%s752] %v793
                %s795 = sadd.s32 1, %s760
                %p796 = scmp.ge.s32.totalorder %s795, %s753
                %s797 = scalar_select %p796, 0, %s795
                %s798 = smul.u32 %s797, 128
                %s799 = smul.u32 %s797, 128
                %s800 = scalar_lea.vmem %s732, %s798 [#allocation2]
                %s801 = scalar_lea.vmem %s743, %s799
              $region69: #{tpu_custom_call.1} parent=63 // loop_footer
                %s757 = sadd.s32 %s755, 1
              $region70: #{tpu_custom_call.1} parent=63 // loop_footer_branch
                %754 = sbr.rel target = $region66
              $region71: #{tpu_custom_call.1} parent=63 // loop_exit
                _
              %s802 = sshrl.u32 %s739, 4
              %s803 = sand.u32 %s739, 15
              %s804 = smul.u32 %s802, 16
              %s805 = smul.u32 8, %s804
              %s806 = scalar_lea.vmem %s732, %s805 [#allocation2]
              %s807 = smul.u32 8, %s804
              %s808 = scalar_lea.vmem %s743, %s807
              // While loop
              $region72: #{tpu_custom_call.1} parent=63 // loop_pre_header
                _
              $region73: #{tpu_custom_call.1} parent=63 // loop_header
                %s810 = sphi 0, %s812
                %p811 = scmp.ge.s32.totalorder %s810, %s803
                %s815 = sphi 0, %s822
                %s816 = sphi %s806, %s825
                %s817 = sphi %s808, %s826
              $region74: #{tpu_custom_call.1} parent=63 // loop_header_branch
                %814 = sbr.rel (%p811) target = $region78
              $region75: #{tpu_custom_call.1} parent=63 // loop_body
                %v818 = vld [vmem:[%s816] sm:%s752]
                %819 = vst [vmem:[%s817] sm:%s752] %v818
                %s820 = sadd.s32 1, %s815
                %p821 = scmp.ge.s32.totalorder %s820, %s803
                %s822 = scalar_select %p821, 0, %s820
                %s823 = smul.u32 %s822, 8
                %s824 = smul.u32 %s822, 8
                %s825 = scalar_lea.vmem %s806, %s823 [#allocation2]
                %s826 = scalar_lea.vmem %s808, %s824
              $region76: #{tpu_custom_call.1} parent=63 // loop_footer
                %s812 = sadd.s32 %s810, 1
              $region77: #{tpu_custom_call.1} parent=63 // loop_footer_branch
                %809 = sbr.rel target = $region73
              $region78: #{tpu_custom_call.1} parent=63 // loop_exit
                _
            $region64: #{tpu_custom_call.1} parent=55 // pred_fallthru
              _
          $region56: #{tpu_custom_call.1} parent=51 // pred_fallthru
            _
          %905 = vnop
        $region52: #{tpu_custom_call.1} parent=47 // pred_fallthru
          _
      $region48: #{tpu_custom_call.1} parent=5 // pred_fallthru
        _
      %p906 = scmp.le.s32.totalorder 2, %s13
      // Predicated region
      $region101: #{tpu_custom_call.1} parent=5 // pred_check
        %p907 = pneg %p906
      $region102: #{tpu_custom_call.1} parent=5 // pred_check_branch
        %909 = sbr.rel (%p907) target = $region104
      $region103: #{tpu_custom_call.1} parent=5 // pred_region
        %s910 = ssub.s32 %s13, 2
        // Predicated region
        $region105: #{tpu_custom_call.1} parent=103 // pred_check
          %p911 = pneg %p194
        $region106: #{tpu_custom_call.1} parent=103 // pred_check_branch
          %913 = sbr.rel (%p911) target = $region108
        $region107: #{tpu_custom_call.1} parent=103 // pred_region
          %s914 = sand.u32 %s179, 1
          %s915 = sand.u32 %s179, 1
          %s916 = smul.addr %s915, 128
          %s917 = scalar_lea.vmem [#allocation2], %s916
        $region108: #{tpu_custom_call.1} parent=103 // pred_fallthru
          _
      $region104: #{tpu_custom_call.1} parent=5 // pred_fallthru
        _
    $region6: #{tpu_custom_call.1} parent=1 // loop_footer
      %s17 = sadd.s32 1, %s13
    $region7: #{tpu_custom_call.1} parent=1 // loop_footer_branch
      %12 = sbr.rel target = $region3
    $region8: #{tpu_custom_call.1} parent=1 // loop_exit
      _

</llo_original>
